<compile_context>
chip_gen: v6e
topology: v6e:2x2x1
jax: 0.10.0
libtpu: 0.0.40
codegen_flags: <defaults>
</compile_context>

<pallas_src>
import jax
import jax.numpy as jnp
from jax.experimental import pallas as pl
from jax.experimental.pallas import tpu as pltpu


def _round_up(x, m):
    return ((x + m - 1) // m) * m


def _pick_hw_tile(hw_p, n_batch, *, max_tile=8192, want_steps=4):
    """Largest lane-aligned divisor tile of hw_p that keeps >= want_steps total
    grid steps (falls back to >=2 steps for v7x megacore, then largest tile)."""
    if hw_p % 128 != 0:
        return hw_p                       # full-spatial block (small latents)
    cands = [t for t in range(128, min(hw_p, max_tile) + 1, 128) if hw_p % t == 0]
    if not cands:
        return hw_p
    for target in (want_steps, 2, 1):
        ok = [t for t in cands if n_batch * (hw_p // t) >= target]
        if ok:
            return max(ok)
    return max(cands)


# ----------------------------------------------------------------------------
# Fused decoder kernel: one (Cin, t_hw) pixel slab -> one (16*Cout, t_hw) slab
# ----------------------------------------------------------------------------
def _fused_decoder_kernel(x_ref, w1_ref, b1_ref, w2_ref, b2_ref, o_ref):
    # x_ref : (Cin, t_hw)      pixel slab of one image (batch dim squeezed)
    # w1_ref: (64, Cin)        layer-1 weights, rows = (kh, kw, c1)
    # b1_ref: (64, 1)
    # w2_ref: (16*Cout, 64)    block-diag layer-2 weights, rows = (kh,kw,kh2,kw2,c2)
    # b2_ref: (16*Cout, 1)
    # o_ref : (16*Cout, t_hw)  lane-major output slab (bf16 store)
    x = x_ref[...].astype(jnp.float32)     # f32 elementwise math on every gen

    # Layer 1: ConvTranspose2d(Cin, Cmid, 2, 2) + ReLU  (K=Cin matmul).
    z = jnp.dot(w1_ref[...], x, preferred_element_type=jnp.float32)
    z = jnp.maximum(z + b1_ref[...], 0.0)

    # Layer 2: ConvTranspose2d(Cmid, Cout, 2, 2) + Sigmoid  (K=4*Cmid matmul).
    y = jnp.dot(w2_ref[...], z, preferred_element_type=jnp.float32)
    y = y + b2_ref[...]
    # sigmoid = 1 / (1 + exp(-y)); exp and the approximate reciprocal both run
    # on the EUP slot, keeping the VALU free.
    o_ref[...] = pl.reciprocal(1.0 + jnp.exp(-y), approx=True).astype(o_ref.dtype)


# ----------------------------------------------------------------------------
# Decoder forward (NCHW in / NCHW out, matching the PyTorch module)
# ----------------------------------------------------------------------------
def decoder_forward(x_nchw, params, *, max_tile=8192, store_dtype=jnp.bfloat16):
    w1, b1 = params["w1"], params["b1"]   # (Cin, Cmid, 2, 2), (Cmid,)
    w2, b2 = params["w2"], params["b2"]   # (Cmid, Cout, 2, 2), (Cout,)
    N, Cin, H, W = x_nchw.shape
    Cmid, Cout = w1.shape[1], w2.shape[1]
    F1 = 4 * Cmid          # 64 layer-1 features per input pixel: (kh, kw, c1)
    F2 = 16 * Cout         # 16 output values per input pixel: (kh,kw,kh2,kw2,c2)

    # ---- one-time weight / bias prep (tiny; VMEM-resident in the kernel) ----
    w1t = jnp.transpose(w1, (2, 3, 1, 0)).reshape(F1, Cin).astype(jnp.float32)
    b1t = jnp.tile(b1, 4).reshape(F1, 1).astype(jnp.float32)
    w2t = jnp.transpose(w2, (2, 3, 1, 0)).reshape(4 * Cout, Cmid)
    w2blk = jnp.kron(jnp.eye(4, dtype=w2t.dtype), w2t).astype(jnp.float32)
    b2t = jnp.tile(b2, 16).reshape(F2, 1).astype(jnp.float32)

    # ---- input: free reshape of NCHW, no transpose / pad round-trip ---------
    HW = H * W
    x_r = x_nchw.reshape(N, Cin, HW)
    HW_p = HW
    if HW % 128 != 0 and HW > 2048:
        # rare fallback: spatial plane too large for a single full-dim block
        HW_p = _round_up(HW, 128)
        x_r = jnp.pad(x_r, ((0, 0), (0, 0), (0, HW_p - HW)))
    t_hw = _pick_hw_tile(HW_p, N, max_tile=max_tile)
    n_tiles = HW_p // t_hw

    o = pl.pallas_call(
        _fused_decoder_kernel,
        out_shape=jax.ShapeDtypeStruct((N, F2, HW_p), store_dtype),
        grid=(N, n_tiles),
        in_specs=[
            # squeezed batch dim: kernel sees the (Cin, t_hw) slab directly
            pl.BlockSpec((None, Cin, t_hw), lambda n, i: (n, 0, i)),
            pl.BlockSpec((F1, Cin), lambda n, i: (0, 0)),   # VMEM-resident
            pl.BlockSpec((F1, 1), lambda n, i: (0, 0)),
            pl.BlockSpec((F2, F1), lambda n, i: (0, 0)),
            pl.BlockSpec((F2, 1), lambda n, i: (0, 0)),
        ],
        out_specs=pl.BlockSpec((None, F2, t_hw), lambda n, i: (n, 0, i)),
        compiler_params=pltpu.CompilerParams(
            dimension_semantics=("parallel", "parallel")),
    )(x_r, w1t, b1t, w2blk, b2t)

    # ---- output: (N, 16*Cout, HW) slab -> NCHW (N, Cout, 4H, 4W) ------------
    # The pixel shuffle runs in bf16 (half the HBM traffic of f32); single
    # upcast at the very end.
    if HW_p != HW:
        o = o[:, :, :HW]
    y = o.reshape(N, 2, 2, 2, 2, Cout, H, W)
    # (n, kh, kw, kh2, kw2, c, h, w) -> (n, c, h, kh, kh2, w, kw, kw2)
    y = jnp.transpose(y, (0, 5, 6, 1, 3, 7, 2, 4))
    # TODO(synk): for deployments with 4*W >= 128 an in-kernel pixel shuffle
    # (row-group stores) would remove this pass; at small W the lane-dense slab
    # + wrapper shuffle is the better trade.
    return y.reshape(N, Cout, 4 * H, 4 * W).astype(x_nchw.dtype)


# ----------------------------------------------------------------------------
# Parameter init (mimics PyTorch default uniform(+-1/sqrt(fan_in)))
# ----------------------------------------------------------------------------
def init_params(key):
    k1, k2, k3, k4 = jax.random.split(key, 4)
    lat, mid, inchannels = 4, 16, 1     # inchannels = 1 (MNIST)
    bound1 = 1.0 / (lat * 2 * 2) ** 0.5
    bound2 = 1.0 / (mid * 2 * 2) ** 0.5
    return {
        "w1": jax.random.uniform(k1, (lat, mid, 2, 2), jnp.float32, -bound1, bound1),
        "b1": jax.random.uniform(k2, (mid,), jnp.float32, -bound1, bound1),
        "w2": jax.random.uniform(k3, (mid, inchannels, 2, 2), jnp.float32, -bound2, bound2),
        "b2": jax.random.uniform(k4, (inchannels,), jnp.float32, -bound2, bound2),
    }


# ----------------------------------------------------------------------------
# Pure-JAX reference (same ConvTranspose2d math, no Pallas, full f32)
# ----------------------------------------------------------------------------
def _ref_convT_2x2_s2(x_nchw, w, b):
    # out[n, co, 2h+kh, 2w+kw] = sum_ci x[n, ci, h, w] * w[ci, co, kh, kw] + b[co]
    y = jnp.einsum("nchw,cokl->nohkwl", x_nchw, w)
    N, Cout, H, _, W, _ = y.shape
    return y.reshape(N, Cout, 2 * H, 2 * W) + b[None, :, None, None]


def decoder_forward_ref(x_nchw, params):
    y = jnp.maximum(_ref_convT_2x2_s2(x_nchw, params["w1"], params["b1"]), 0.0)
    y = jax.nn.sigmoid(_ref_convT_2x2_s2(y, params["w2"], params["b2"]))
    return y


if __name__ == "__main__":
    key = jax.random.PRNGKey(0)
    kp, kx = jax.random.split(key)
    params = init_params(kp)

    # Latent input: batch=2, channels=4, spatial 16x16 (HW=256 -> two
    # lane-aligned 128-pixel tiles per image, 4 grid steps total).
    x = jax.random.normal(kx, (2, 4, 16, 16), jnp.float32)

    out = jax.block_until_ready(decoder_forward(x, params))
    assert out.shape == (2, 1, 64, 64), out.shape

    ref = decoder_forward_ref(x, params)
    # bf16 output storage + approx reciprocal -> loosened tolerance (outputs
    # live in [0, 1], bf16 quantization step <= ~4e-3).
    assert jnp.allclose(out, ref, atol=1e-2, rtol=1e-2), \
        float(jnp.max(jnp.abs(out - ref)))

    print("KERNEL_OK")
</pallas_src>

<mosaic_0001>
module attributes {stable_mosaic.version = 11 : i64} {
  func.func @_fused_decoder_kernel(%arg0: i32, %arg1: i32, %arg2: memref<1x4x128xf32, #tpu.memory_space<vmem>>, %arg3: memref<64x4xf32, #tpu.memory_space<vmem>>, %arg4: memref<64x1xf32, #tpu.memory_space<vmem>>, %arg5: memref<16x64xf32, #tpu.memory_space<vmem>>, %arg6: memref<16x1xf32, #tpu.memory_space<vmem>>, %arg7: memref<1x16x128xbf16, #tpu.memory_space<vmem>>) attributes {dimension_semantics = [#tpu.dimension_semantics<parallel>, #tpu.dimension_semantics<parallel>], iteration_bounds = array<i64: 2, 2>, scalar_prefetch = 0 : i64, scratch_operands = 0 : i64, tpu.core_type = #tpu.core_type<tc>, window_params = [{transform_indices = @transform_0, window_bounds = array<i64: 1, 4, 128>}, {pipeline_mode = #tpu.pipeline_mode<synchronous>, transform_indices = @transform_1, window_bounds = array<i64: 64, 4>}, {pipeline_mode = #tpu.pipeline_mode<synchronous>, transform_indices = @transform_2, window_bounds = array<i64: 64, 1>}, {pipeline_mode = #tpu.pipeline_mode<synchronous>, transform_indices = @transform_3, window_bounds = array<i64: 16, 64>}, {pipeline_mode = #tpu.pipeline_mode<synchronous>, transform_indices = @transform_4, window_bounds = array<i64: 16, 1>}, {transform_indices = @transform_5, window_bounds = array<i64: 1, 16, 128>}]} {
    %c0 = arith.constant 0 : index
    %c0_0 = arith.constant 0 : index
    %c0_1 = arith.constant 0 : index
    %0 = vector.load %arg2[%c0, %c0_0, %c0_1] : memref<1x4x128xf32, #tpu.memory_space<vmem>>, vector<1x4x128xf32>
    %1 = vector.shape_cast %0 : vector<1x4x128xf32> to vector<4x128xf32>
    %c0_2 = arith.constant 0 : index
    %c0_3 = arith.constant 0 : index
    %2 = vector.load %arg3[%c0_2, %c0_3] : memref<64x4xf32, #tpu.memory_space<vmem>>, vector<64x4xf32>
    %cst = arith.constant dense<0.000000e+00> : vector<64x128xf32>
    %3 = tpu.matmul %2, %1, %cst {dimension_numbers = #tpu.dot_dimension_numbers<[1], [0], [0], [1], [0, 0, 1, 1], [], []>} : vector<64x4xf32>, vector<4x128xf32>, vector<64x128xf32> -> vector<64x128xf32>
    %c0_4 = arith.constant 0 : index
    %c0_5 = arith.constant 0 : index
    %4 = vector.load %arg4[%c0_4, %c0_5] : memref<64x1xf32, #tpu.memory_space<vmem>>, vector<64x1xf32>
    %5 = vector.broadcast %4 : vector<64x1xf32> to vector<64x128xf32>
    %6 = arith.addf %3, %5 : vector<64x128xf32>
    %cst_6 = arith.constant 0.000000e+00 : f32
    %7 = vector.broadcast %cst_6 : f32 to vector<64x128xf32>
    %8 = arith.maximumf %6, %7 : vector<64x128xf32>
    %c0_7 = arith.constant 0 : index
    %c0_8 = arith.constant 0 : index
    %9 = vector.load %arg5[%c0_7, %c0_8] : memref<16x64xf32, #tpu.memory_space<vmem>>, vector<16x64xf32>
    %cst_9 = arith.constant dense<0.000000e+00> : vector<16x128xf32>
    %10 = tpu.matmul %9, %8, %cst_9 {dimension_numbers = #tpu.dot_dimension_numbers<[1], [0], [0], [1], [0, 0, 1, 1], [], []>} : vector<16x64xf32>, vector<64x128xf32>, vector<16x128xf32> -> vector<16x128xf32>
    %c0_10 = arith.constant 0 : index
    %c0_11 = arith.constant 0 : index
    %11 = vector.load %arg6[%c0_10, %c0_11] : memref<16x1xf32, #tpu.memory_space<vmem>>, vector<16x1xf32>
    %12 = vector.broadcast %11 : vector<16x1xf32> to vector<16x128xf32>
    %13 = arith.addf %10, %12 : vector<16x128xf32>
    %cst_12 = arith.constant 0.000000e+00 : f32
    %14 = vector.broadcast %cst_12 : f32 to vector<16x128xf32>
    %15 = arith.subf %14, %13 : vector<16x128xf32>
    %16 = math.exp %15 : vector<16x128xf32>
    %cst_13 = arith.constant 1.000000e+00 : f32
    %17 = vector.broadcast %cst_13 : f32 to vector<16x128xf32>
    %18 = arith.addf %17, %16 : vector<16x128xf32>
    %19 = tpu.reciprocal %18 {approx = true} : vector<16x128xf32> -> vector<16x128xf32>
    %20 = arith.truncf %19 : vector<16x128xf32> to vector<16x128xbf16>
    %c0_14 = arith.constant 0 : index
    %c0_15 = arith.constant 0 : index
    %c0_16 = arith.constant 0 : index
    %21 = vector.load %arg7[%c0_14, %c0_15, %c0_16] : memref<1x16x128xbf16, #tpu.memory_space<vmem>>, vector<1x16x128xbf16>
    %22 = vector.shape_cast %21 : vector<1x16x128xbf16> to vector<16x128xbf16>
    %23 = vector.shape_cast %20 : vector<16x128xbf16> to vector<1x16x128xbf16>
    tpu.vector_store %arg7[%c0_14, %c0_15, %c0_16], %23 {strides = array<i32>} : memref<1x16x128xbf16, #tpu.memory_space<vmem>>, vector<1x16x128xbf16>,
    return
  }
  func.func @transform_0(%arg0: i32, %arg1: i32) -> (i32, i32, i32) {
    %c0_i32 = arith.constant 0 : i32
    %c0_i32_0 = arith.constant 0 : i32
    return %arg0, %c0_i32, %arg1 : i32, i32, i32
  }
  func.func @transform_1(%arg0: i32, %arg1: i32) -> (i32, i32) {
    %c0_i32 = arith.constant 0 : i32
    %c0_i32_0 = arith.constant 0 : i32
    %c0_i32_1 = arith.constant 0 : i32
    return %c0_i32, %c0_i32_0 : i32, i32
  }
  func.func @transform_2(%arg0: i32, %arg1: i32) -> (i32, i32) {
    %c0_i32 = arith.constant 0 : i32
    %c0_i32_0 = arith.constant 0 : i32
    %c0_i32_1 = arith.constant 0 : i32
    return %c0_i32, %c0_i32_0 : i32, i32
  }
  func.func @transform_3(%arg0: i32, %arg1: i32) -> (i32, i32) {
    %c0_i32 = arith.constant 0 : i32
    %c0_i32_0 = arith.constant 0 : i32
    %c0_i32_1 = arith.constant 0 : i32
    return %c0_i32, %c0_i32_0 : i32, i32
  }
  func.func @transform_4(%arg0: i32, %arg1: i32) -> (i32, i32) {
    %c0_i32 = arith.constant 0 : i32
    %c0_i32_0 = arith.constant 0 : i32
    %c0_i32_1 = arith.constant 0 : i32
    return %c0_i32, %c0_i32_0 : i32, i32
  }
  func.func @transform_5(%arg0: i32, %arg1: i32) -> (i32, i32, i32) {
    %c0_i32 = arith.constant 0 : i32
    %c0_i32_0 = arith.constant 0 : i32
    return %arg0, %c0_i32, %arg1 : i32, i32, i32
  }
}

</mosaic_0001>

<llo_original>
// kernel: tpu_custom_call.1
$region0: #{tpu_custom_call.1}
  #allocation0 [shape = 'u32[]', space=smem, size = 0x4, offset = 0x4, fixed_abs, tag = 'smem constant byte address 0x4 - core index']
  #allocation1 [shape = 'u32[144,128]{1,0:T(1,128)}', space=vmem, size = 0x12000, scoped, tag = 'internal scratch']
  %s0 = inlined_call_operand.vmem [shape: f32[2,4,256], index: 0, kind: input, shape index: {}]
  %s1 = inlined_call_operand.vmem [shape: f32[64,4], index: 1, kind: input, shape index: {}]
  %s2 = inlined_call_operand.vmem [shape: f32[64,1], index: 2, kind: input, shape index: {}]
  %s3 = inlined_call_operand.vmem [shape: f32[16,64], index: 3, kind: input, shape index: {}]
  %s4 = inlined_call_operand.vmem [shape: f32[16,1], index: 4, kind: input, shape index: {}]
  %s5 = inlined_call_operand.hbm [shape: bf16[2,16,256], index: 5, kind: output, shape index: {}]
  %s6 = sld [smem:[#allocation0]]
  $region53: #{tpu_custom_call.1} parent=0
    _
  %s8 = ssub.s32 1, %s6
  %s9 = scalar_select 0, %s8, %s6
  $region1: #{tpu_custom_call.1} parent=0
    #allocation2 [shape = 'u8[8192]{0}', space=vmem, size = 0x2000, scoped, tag = 'output window, operand 0']
    #allocation3 [shape = 's32[2]{0}', space=sflag, size = 0x8, scoped, tag = 'scoped memory for tpu_custom_call.1']
    %10 = vsyncpa [#allocation3], 0
    %s11 = scalar_lea.sflag [#allocation3], 1
    %12 = vsyncpa %s11, 0
    loop: start=0, step=1, limit=6
    $region2: #{tpu_custom_call.1} parent=1 // loop_pre_header
      _
    $region3: #{tpu_custom_call.1} parent=1 // loop_header
      %s14 = sphi 0, %s18
      %p15 = scmp.ge.s32.totalorder %s14, 6
      %s21 = sphi 0, %s33
      %s22 = sphi 0, %s29
      %s23 = sphi 0, %s21
      %s24 = sphi 0, %s22
      %s25 = sphi 0, %s23
      %s26 = sphi 0, %s24
      %s38 = sphi 0, %s40
      %s41 = sphi 0, %s38
      %s42 = sphi 0, %s41
      %s58 = sphi 0, %s42
      %s62 = sphi 0, %s62
      %s64 = sphi 0, %s62
      %s65 = sphi 0, %s64
      %s79 = sphi 0, %s65
      %s83 = sphi 0, %s83
      %s85 = sphi 0, %s83
      %s86 = sphi 0, %s85
      %s100 = sphi 0, %s86
      %s104 = sphi 0, %s104
      %s106 = sphi 0, %s104
      %s107 = sphi 0, %s106
      %s121 = sphi 0, %s107
      %s125 = sphi 0, %s125
      %s127 = sphi 0, %s125
      %s128 = sphi 0, %s127
      %s142 = sphi 0, %s128
      %s150 = sphi 0, %s152
      %s153 = sphi 0, %s150
      %s154 = sphi 0, %s153
      %s170 = sphi 0, %s154
    $region4: #{tpu_custom_call.1} parent=1 // loop_header_branch
      %17 = sbr.rel (%p15) target = $region8
    $region5: #{tpu_custom_call.1} parent=1 // loop_body
      %s19 = ssub.s32 %s14, 1
      %s20 = ssub.s32 %s14, 2
      %s27 = sadd.s32 1, %s22
      %p28 = scmp.ge.s32.totalorder %s27, 2
      %s29 = scalar_select %p28, 0, %s27
      %s30 = sadd.s32 1, %s21
      %s31 = scalar_select %p28, %s30, %s21
      %p32 = scmp.ge.s32.totalorder %s31, 2
      %s33 = scalar_select %p32, 0, %s31
      %s34 = ssub.s32 %s21, %s33
      %s35 = ssub.s32 %s22, %s29
      %s36 = sor.u32 %s34, %s35
      %p37 = scmp.eq.s32.totalorder %s36, 0
      %s39 = sadd.s32 %s38, 1
      %s40 = scalar_select %p37, %s38, %s39
      %p43 = pneg %p37
      %p44 = scmp.eq.s32.totalorder %s14, 3
      %p45 = por %p43, %p44
      %p46 = scmp.ne.s32.totalorder %s38, %s41
      %p47 = scmp.eq.s32.totalorder %s14, 0
      %p48 = por %p46, %p47
      %p49 = scmp.ne.s32.totalorder %s38, %s41
      %p50 = scmp.eq.s32.totalorder %s19, 3
      %p51 = por %p49, %p50
      %p52 = scmp.ne.s32.totalorder %s41, %s42
      %p53 = scmp.eq.s32.totalorder %s19, 0
      %p54 = por %p52, %p53
      %p55 = scmp.ne.s32.totalorder %s41, %s42
      %p56 = scmp.eq.s32.totalorder %s20, 3
      %p57 = por %p55, %p56
      %p59 = scmp.ne.s32.totalorder %s42, %s58
      %p60 = scmp.eq.s32.totalorder %s20, 0
      %p61 = por %p59, %p60
      %s63 = sadd.s32 %s62, 1
      %p66 = scmp.eq.s32.totalorder %s14, 3
      %p67 = scmp.ne.s32.totalorder %s62, %s64
      %p68 = scmp.eq.s32.totalorder %s14, 0
      %p69 = por %p67, %p68
      %p70 = scmp.ne.s32.totalorder %s62, %s64
      %p71 = scmp.eq.s32.totalorder %s19, 3
      %p72 = por %p70, %p71
      %p73 = scmp.ne.s32.totalorder %s64, %s65
      %p74 = scmp.eq.s32.totalorder %s19, 0
      %p75 = por %p73, %p74
      %p76 = scmp.ne.s32.totalorder %s64, %s65
      %p77 = scmp.eq.s32.totalorder %s20, 3
      %p78 = por %p76, %p77
      %p80 = scmp.ne.s32.totalorder %s65, %s79
      %p81 = scmp.eq.s32.totalorder %s20, 0
      %p82 = por %p80, %p81
      %s84 = sadd.s32 %s83, 1
      %p87 = scmp.eq.s32.totalorder %s14, 3
      %p88 = scmp.ne.s32.totalorder %s83, %s85
      %p89 = scmp.eq.s32.totalorder %s14, 0
      %p90 = por %p88, %p89
      %p91 = scmp.ne.s32.totalorder %s83, %s85
      %p92 = scmp.eq.s32.totalorder %s19, 3
      %p93 = por %p91, %p92
      %p94 = scmp.ne.s32.totalorder %s85, %s86
      %p95 = scmp.eq.s32.totalorder %s19, 0
      %p96 = por %p94, %p95
      %p97 = scmp.ne.s32.totalorder %s85, %s86
      %p98 = scmp.eq.s32.totalorder %s20, 3
      %p99 = por %p97, %p98
      %p101 = scmp.ne.s32.totalorder %s86, %s100
      %p102 = scmp.eq.s32.totalorder %s20, 0
      %p103 = por %p101, %p102
      %s105 = sadd.s32 %s104, 1
      %p108 = scmp.eq.s32.totalorder %s14, 3
      %p109 = scmp.ne.s32.totalorder %s104, %s106
      %p110 = scmp.eq.s32.totalorder %s14, 0
      %p111 = por %p109, %p110
      %p112 = scmp.ne.s32.totalorder %s104, %s106
      %p113 = scmp.eq.s32.totalorder %s19, 3
      %p114 = por %p112, %p113
      %p115 = scmp.ne.s32.totalorder %s106, %s107
      %p116 = scmp.eq.s32.totalorder %s19, 0
      %p117 = por %p115, %p116
      %p118 = scmp.ne.s32.totalorder %s106, %s107
      %p119 = scmp.eq.s32.totalorder %s20, 3
      %p120 = por %p118, %p119
      %p122 = scmp.ne.s32.totalorder %s107, %s121
      %p123 = scmp.eq.s32.totalorder %s20, 0
      %p124 = por %p122, %p123
      %s126 = sadd.s32 %s125, 1
      %p129 = scmp.eq.s32.totalorder %s14, 3
      %p130 = scmp.ne.s32.totalorder %s125, %s127
      %p131 = scmp.eq.s32.totalorder %s14, 0
      %p132 = por %p130, %p131
      %p133 = scmp.ne.s32.totalorder %s125, %s127
      %p134 = scmp.eq.s32.totalorder %s19, 3
      %p135 = por %p133, %p134
      %p136 = scmp.ne.s32.totalorder %s127, %s128
      %p137 = scmp.eq.s32.totalorder %s19, 0
      %p138 = por %p136, %p137
      %p139 = scmp.ne.s32.totalorder %s127, %s128
      %p140 = scmp.eq.s32.totalorder %s20, 3
      %p141 = por %p139, %p140
      %p143 = scmp.ne.s32.totalorder %s128, %s142
      %p144 = scmp.eq.s32.totalorder %s20, 0
      %p145 = por %p143, %p144
      %s146 = ssub.s32 %s21, %s33
      %s147 = ssub.s32 %s22, %s29
      %s148 = sor.u32 %s146, %s147
      %p149 = scmp.eq.s32.totalorder %s148, 0
      %s151 = sadd.s32 %s150, 1
      %s152 = scalar_select %p149, %s150, %s151
      %p155 = pneg %p149
      %p156 = scmp.eq.s32.totalorder %s14, 3
      %p157 = por %p155, %p156
      %p158 = scmp.ne.s32.totalorder %s150, %s153
      %p159 = scmp.eq.s32.totalorder %s14, 0
      %p160 = por %p158, %p159
      %p161 = scmp.ne.s32.totalorder %s150, %s153
      %p162 = scmp.eq.s32.totalorder %s19, 3
      %p163 = por %p161, %p162
      %p164 = scmp.ne.s32.totalorder %s153, %s154
      %p165 = scmp.eq.s32.totalorder %s19, 0
      %p166 = por %p164, %p165
      %p167 = scmp.ne.s32.totalorder %s153, %s154
      %p168 = scmp.eq.s32.totalorder %s20, 3
      %p169 = por %p167, %p168
      %p171 = scmp.ne.s32.totalorder %s154, %s170
      %p172 = scmp.eq.s32.totalorder %s20, 0
      %p173 = por %p171, %p172
      %p174 = scmp.le.s32.totalorder 1, %s14
      %p175 = scmp.lt.s32.totalorder %s14, 5
      %p176 = pnand %p174, %p175
      %p177 = pneg %p176
      // Predicated region
      $region9: #{tpu_custom_call.1} parent=5 // pred_check
        _
      $region10: #{tpu_custom_call.1} parent=5 // pred_check_branch
        %179 = sbr.rel (%p176) target = $region12
      $region11: #{tpu_custom_call.1} parent=5 // pred_region
        %s180 = ssub.s32 %s14, 1
        // Predicated region
        $region13: #{tpu_custom_call.1} parent=11 // pred_check
          %p181 = pneg %p75
        $region14: #{tpu_custom_call.1} parent=11 // pred_check_branch
          %183 = sbr.rel (%p181) target = $region16
        $region15: #{tpu_custom_call.1} parent=11 // pred_region
          _
        $region16: #{tpu_custom_call.1} parent=11 // pred_fallthru
          _
        // Predicated region
        $region17: #{tpu_custom_call.1} parent=11 // pred_check
          %p184 = pneg %p96
        $region18: #{tpu_custom_call.1} parent=11 // pred_check_branch
          %186 = sbr.rel (%p184) target = $region20
        $region19: #{tpu_custom_call.1} parent=11 // pred_region
          _
        $region20: #{tpu_custom_call.1} parent=11 // pred_fallthru
          _
        // Predicated region
        $region21: #{tpu_custom_call.1} parent=11 // pred_check
          %p187 = pneg %p117
        $region22: #{tpu_custom_call.1} parent=11 // pred_check_branch
          %189 = sbr.rel (%p187) target = $region24
        $region23: #{tpu_custom_call.1} parent=11 // pred_region
          _
        $region24: #{tpu_custom_call.1} parent=11 // pred_fallthru
          _
        // Predicated region
        $region25: #{tpu_custom_call.1} parent=11 // pred_check
          %p190 = pneg %p138
        $region26: #{tpu_custom_call.1} parent=11 // pred_check_branch
          %192 = sbr.rel (%p190) target = $region28
        $region27: #{tpu_custom_call.1} parent=11 // pred_region
          _
        $region28: #{tpu_custom_call.1} parent=11 // pred_fallthru
          _
      $region12: #{tpu_custom_call.1} parent=5 // pred_fallthru
        _
      %p193 = scmp.lt.s32.totalorder %s14, 4
      // Predicated region
      $region29: #{tpu_custom_call.1} parent=5 // pred_check
        %p194 = pneg %p193
      $region30: #{tpu_custom_call.1} parent=5 // pred_check_branch
        %196 = sbr.rel (%p194) target = $region32
      $region31: #{tpu_custom_call.1} parent=5 // pred_region
        // Predicated region
        $region33: #{tpu_custom_call.1} parent=31 // pred_check
          %p197 = pneg %p48
        $region34: #{tpu_custom_call.1} parent=31 // pred_check_branch
          %199 = sbr.rel (%p197) target = $region36
        $region35: #{tpu_custom_call.1} parent=31 // pred_region
          %p200 = scmp.lt.s32.totalorder %s21, 1
          %s201 = scalar_select %p200, %s21, 1
          %p202 = scmp.lt.s32.totalorder %s22, 1
          %s203 = scalar_select %p202, %s22, 1
          %s204 = smul.addr %s201, 2
          %s205 = sadd.s32 %s203, %s204
          %s206 = smul.addr %s205, 4
          %s207 = scalar_lea.vmem %s0, %s206
        $region36: #{tpu_custom_call.1} parent=31 // pred_fallthru
          _
      $region32: #{tpu_custom_call.1} parent=5 // pred_fallthru
        _
      %p208 = scmp.le.s32.totalorder 1, %s14
      %p209 = scmp.lt.s32.totalorder %s14, 5
      %p210 = pnand %p208, %p209
      %p211 = pneg %p210
      // Predicated region
      $region37: #{tpu_custom_call.1} parent=5 // pred_check
        _
      $region38: #{tpu_custom_call.1} parent=5 // pred_check_branch
        %213 = sbr.rel (%p210) target = $region40
      $region39: #{tpu_custom_call.1} parent=5 // pred_region
        %s214 = ssub.s32 %s14, 1
        %p215 = scmp.lt.s32.totalorder %s23, 1
        %s216 = scalar_select %p215, %s23, 1
        %p217 = scmp.lt.s32.totalorder %s24, 1
        %s218 = scalar_select %p217, %s24, 1
        %s219 = smul.addr %s216, 2
        %s220 = sadd.s32 %s218, %s219
        %s221 = smul.addr %s220, 4
        %s222 = scalar_lea.vmem %s0, %s221
        %p223 = pneg %p54
        %p224 = pneg %p51
        %p225 = pneg %p75
        %p226 = pneg %p72
        %p227 = pneg %p96
        %p228 = pneg %p93
        %p229 = pneg %p117
        %p230 = pneg %p114
        %p231 = pneg %p138
        %p232 = pneg %p135
        %p233 = pneg %p166
        %p234 = pneg %p163
        %s235 = sand.u32 %s153, 1
        %s236 = scalar_lea.sflag [#allocation3], %s235
        %s237 = sand.u32 %s153, 1
        %s238 = smul.addr %s237, 8
        %s239 = scalar_lea.vmem [#allocation2], %s238
        %p240 = scmp.lt.s32.totalorder %s23, 1
        %s241 = scalar_select %p240, %s23, 1
        %p242 = scmp.lt.s32.totalorder %s24, 1
        %s243 = scalar_select %p242, %s24, 1
        %s244 = smul.addr %s241, 2
        %s245 = sadd.s32 %s243, %s244
        %s246 = smul.addr %s245, 4
        %s247 = scalar_lea.vmem %s0, %s246
        %v248 = vld [vmem:[%s247] sm:$0xf]
        %v249 = vld [vmem:[%s1] sm:$0xff]
        %v250 = vld [vmem:[%s1 + $0x8] sm:$0xff]
        %v251 = vld [vmem:[%s1 + $0x10] sm:$0xff]
        %v252 = vld [vmem:[%s1 + $0x18] sm:$0xff]
        %v253 = vld [vmem:[%s1 + $0x20] sm:$0xff]
        %v254 = vld [vmem:[%s1 + $0x28] sm:$0xff]
        %v255 = vld [vmem:[%s1 + $0x30] sm:$0xff]
        %v256 = vld [vmem:[%s1 + $0x38] sm:$0xff]
        %v257 = vld [vmem:[%s2] sm:$0xff]
        %v258 = vld [vmem:[%s2 + $0x8] sm:$0xff]
        %v259 = vld [vmem:[%s2 + $0x10] sm:$0xff]
        %v260 = vld [vmem:[%s2 + $0x18] sm:$0xff]
        %v261 = vld [vmem:[%s2 + $0x20] sm:$0xff]
        %v262 = vld [vmem:[%s2 + $0x28] sm:$0xff]
        %v263 = vld [vmem:[%s2 + $0x30] sm:$0xff]
        %v264 = vld [vmem:[%s2 + $0x38] sm:$0xff]
        %266 = vset.pattern.permute.xlu0 0
        %267 = vperm.xlu0 %266, %v257
        %v268 = vpop.permute.xlu0 %267
        %271 = vset.pattern.permute.xlu0 0
        %272 = vperm.xlu0 %271, %v258
        %v273 = vpop.permute.xlu0 %272
        %276 = vset.pattern.permute.xlu0 0
        %277 = vperm.xlu0 %276, %v259
        %v278 = vpop.permute.xlu0 %277
        %281 = vset.pattern.permute.xlu0 0
        %282 = vperm.xlu0 %281, %v260
        %v283 = vpop.permute.xlu0 %282
        %286 = vset.pattern.permute.xlu0 0
        %287 = vperm.xlu0 %286, %v261
        %v288 = vpop.permute.xlu0 %287
        %291 = vset.pattern.permute.xlu0 0
        %292 = vperm.xlu0 %291, %v262
        %v293 = vpop.permute.xlu0 %292
        %296 = vset.pattern.permute.xlu0 0
        %297 = vperm.xlu0 %296, %v263
        %v298 = vpop.permute.xlu0 %297
        %301 = vset.pattern.permute.xlu0 0
        %302 = vperm.xlu0 %301, %v264
        %v303 = vpop.permute.xlu0 %302
        %vm305 = vcmask 31744
        %v307 = vsel %vm305, %v249, 0
        %v310 = vsel %vm305, %v250, 0
        %v313 = vsel %vm305, %v251, 0
        %v316 = vsel %vm305, %v252, 0
        %v319 = vsel %vm305, %v253, 0
        %v322 = vsel %vm305, %v254, 0
        %v325 = vsel %vm305, %v255, 0
        %v328 = vsel %vm305, %v256, 0
        %vm330 = vcmask 1043456
        %v332 = vsel %vm330, %v248, 0
        %334 = vmatprep.subr.mxu0 0.0
        %335 = vmatpush1.msra.mxu0 0.0
        %336 = vmatprep.subr.mxu0 0.0
        %337 = vmatpush1.msra.mxu0 0.0
        %338 = vmatprep.subr.mxu0 0.0
        %339 = vmatpush1.msra.mxu0 0.0
        %340 = vmatprep.subr.mxu0 0.0
        %341 = vmatpush1.msra.mxu0 0.0
        %342 = vmatprep.subr.mxu0 0.0
        %343 = vmatpush1.msra.mxu0 0.0
        %344 = vmatprep.subr.mxu0 0.0
        %345 = vmatpush1.msra.mxu0 0.0
        %346 = vmatprep.subr.mxu0 0.0
        %347 = vmatpush1.msra.mxu0 0.0
        %348 = vmatprep.subr.mxu0 0.0
        %349 = vmatpush1.msra.mxu0 0.0
        %350 = vmatprep.subr.mxu0 0.0
        %351 = vmatpush1.msra.mxu0 0.0
        %352 = vmatprep.subr.mxu0 0.0
        %353 = vmatpush1.msra.mxu0 0.0
        %354 = vmatprep.subr.mxu0 0.0
        %355 = vmatpush1.msra.mxu0 0.0
        %356 = vmatprep.subr.mxu0 0.0
        %357 = vmatpush1.msra.mxu0 0.0
        %358 = vmatprep.subr.mxu0 0.0
        %359 = vmatpush1.msra.mxu0 0.0
        %360 = vmatprep.subr.mxu0 0.0
        %361 = vmatpush1.msra.mxu0 0.0
        %362 = vmatprep.subr.mxu0 0.0
        %363 = vmatpush1.msra.mxu0 0.0
        %364 = vmatprep.subr.mxu0 0.0
        %365 = vmatpush1.msra.mxu0 %v332
        %366 = vmatprep.subr.mxu0 0.0
        %367 = vmatpush2.msra.mxu0 0.0
        %368 = vmatprep.subr.mxu0 0.0
        %369 = vmatpush2.msra.mxu0 0.0
        %370 = vmatprep.subr.mxu0 0.0
        %371 = vmatpush2.msra.mxu0 0.0
        %372 = vmatprep.subr.mxu0 0.0
        %373 = vmatpush2.msra.mxu0 0.0
        %374 = vmatprep.subr.mxu0 0.0
        %375 = vmatpush2.msra.mxu0 0.0
        %376 = vmatprep.subr.mxu0 0.0
        %377 = vmatpush2.msra.mxu0 0.0
        %378 = vmatprep.subr.mxu0 0.0
        %379 = vmatpush2.msra.mxu0 0.0
        %380 = vmatprep.subr.mxu0 0.0
        %381 = vmatpush2.msra.mxu0 0.0
        %382 = vmatprep.subr.mxu0 0.0
        %383 = vmatpush2.msra.mxu0 0.0
        %384 = vmatprep.subr.mxu0 0.0
        %385 = vmatpush2.msra.mxu0 0.0
        %386 = vmatprep.subr.mxu0 0.0
        %387 = vmatpush2.msra.mxu0 0.0
        %388 = vmatprep.subr.mxu0 0.0
        %389 = vmatpush2.msra.mxu0 0.0
        %390 = vmatprep.subr.mxu0 0.0
        %391 = vmatpush2.msra.mxu0 0.0
        %392 = vmatprep.subr.mxu0 0.0
        %393 = vmatpush2.msra.mxu0 0.0
        %394 = vmatprep.subr.mxu0 0.0
        %395 = vmatpush2.msra.mxu0 0.0
        %396 = vmatprep.subr.mxu0 0.0
        %397 = vmatpush2.msra.mxu0 0.0
        %398 = vmatprep.mubr.f32.mxu0 0.0
        %399 = vmatmul.mubr.f32.gmra.mxu0 %v307
        %v400 = vpop.f32.mrf.mxu0
        %v401 = vadd.f32 %v268, %v400
        %v402 = vpop.f32.mrf.mxu0
        %403 = vmatprep.mubr.f32.mxu0 0.0
        %404 = vmatmul.mubr.f32.gmra.mxu0 %v310
        %v405 = vpop.f32.mrf.mxu0
        %v406 = vadd.f32 %v273, %v405
        %v407 = vpop.f32.mrf.mxu0
        %408 = vmatprep.mubr.f32.mxu0 0.0
        %409 = vmatmul.mubr.f32.gmra.mxu0 %v313
        %v410 = vpop.f32.mrf.mxu0
        %v411 = vadd.f32 %v278, %v410
        %v412 = vpop.f32.mrf.mxu0
        %413 = vmatprep.mubr.f32.mxu0 0.0
        %414 = vmatmul.mubr.f32.gmra.mxu0 %v316
        %v415 = vpop.f32.mrf.mxu0
        %v416 = vadd.f32 %v283, %v415
        %v417 = vpop.f32.mrf.mxu0
        %418 = vmatprep.mubr.f32.mxu0 0.0
        %419 = vmatmul.mubr.f32.gmra.mxu0 %v319
        %v420 = vpop.f32.mrf.mxu0
        %v421 = vadd.f32 %v288, %v420
        %v422 = vpop.f32.mrf.mxu0
        %423 = vmatprep.mubr.f32.mxu0 0.0
        %424 = vmatmul.mubr.f32.gmra.mxu0 %v322
        %v425 = vpop.f32.mrf.mxu0
        %v426 = vadd.f32 %v293, %v425
        %v427 = vpop.f32.mrf.mxu0
        %428 = vmatprep.mubr.f32.mxu0 0.0
        %429 = vmatmul.mubr.f32.gmra.mxu0 %v325
        %v430 = vpop.f32.mrf.mxu0
        %v431 = vadd.f32 %v298, %v430
        %v432 = vpop.f32.mrf.mxu0
        %433 = vmatprep.mubr.f32.mxu0 0.0
        %434 = vmatmul.mubr.f32.gmra.mxu0 %v328
        %v435 = vpop.f32.mrf.mxu0
        %v436 = vadd.f32 %v303, %v435
        %v437 = vpop.f32.mrf.mxu0
        %438 = vdwg.mxu0
        %v439 = vmax.f32 %v401, 0.0
        %v440 = vmax.f32 %v406, 0.0
        %v441 = vmax.f32 %v411, 0.0
        %v442 = vmax.f32 %v416, 0.0
        %v443 = vmax.f32 %v421, 0.0
        %v444 = vmax.f32 %v426, 0.0
        %v445 = vmax.f32 %v431, 0.0
        %v446 = vmax.f32 %v436, 0.0
        %v447 = vld [vmem:[%s3] sm:$0xff]
        %v448 = vld [vmem:[%s3 + $0x8] sm:$0xff]
        %v449 = vld [vmem:[%s4] sm:$0xff]
        %v450 = vld [vmem:[%s4 + $0x8] sm:$0xff]
        %452 = vset.pattern.permute.xlu0 0
        %453 = vperm.xlu0 %452, %v449
        %v454 = vpop.permute.xlu0 %453
        %457 = vset.pattern.permute.xlu0 0
        %458 = vperm.xlu0 %457, %v450
        %v459 = vpop.permute.xlu0 %458
        %vm461 = vcmask 523264
        %v463 = vsel %vm461, %v447, 0
        %v466 = vsel %vm461, %v448, 0
        %468 = vmatprep.subr.mxu0 0.0
        %469 = vmatpush1.msra.mxu0 0.0
        %470 = vmatprep.subr.mxu0 0.0
        %471 = vmatpush1.msra.mxu0 0.0
        %472 = vmatprep.subr.mxu0 0.0
        %473 = vmatpush1.msra.mxu0 0.0
        %474 = vmatprep.subr.mxu0 0.0
        %475 = vmatpush1.msra.mxu0 0.0
        %476 = vmatprep.subr.mxu0 0.0
        %477 = vmatpush1.msra.mxu0 0.0
        %478 = vmatprep.subr.mxu0 0.0
        %479 = vmatpush1.msra.mxu0 0.0
        %480 = vmatprep.subr.mxu0 0.0
        %481 = vmatpush1.msra.mxu0 0.0
        %482 = vmatprep.subr.mxu0 0.0
        %483 = vmatpush1.msra.mxu0 0.0
        %484 = vmatprep.subr.mxu0 0.0
        %485 = vmatpush1.msra.mxu0 %v446
        %486 = vmatprep.subr.mxu0 0.0
        %487 = vmatpush1.msra.mxu0 %v445
        %488 = vmatprep.subr.mxu0 0.0
        %489 = vmatpush1.msra.mxu0 %v444
        %490 = vmatprep.subr.mxu0 0.0
        %491 = vmatpush1.msra.mxu0 %v443
        %492 = vmatprep.subr.mxu0 0.0
        %493 = vmatpush1.msra.mxu0 %v442
        %494 = vmatprep.subr.mxu0 0.0
        %495 = vmatpush1.msra.mxu0 %v441
        %496 = vmatprep.subr.mxu0 0.0
        %497 = vmatpush1.msra.mxu0 %v440
        %498 = vmatprep.subr.mxu0 0.0
        %499 = vmatpush1.msra.mxu0 %v439
        %500 = vmatprep.subr.mxu0 0.0
        %501 = vmatpush2.msra.mxu0 0.0
        %502 = vmatprep.subr.mxu0 0.0
        %503 = vmatpush2.msra.mxu0 0.0
        %504 = vmatprep.subr.mxu0 0.0
        %505 = vmatpush2.msra.mxu0 0.0
        %506 = vmatprep.subr.mxu0 0.0
        %507 = vmatpush2.msra.mxu0 0.0
        %508 = vmatprep.subr.mxu0 0.0
        %509 = vmatpush2.msra.mxu0 0.0
        %510 = vmatprep.subr.mxu0 0.0
        %511 = vmatpush2.msra.mxu0 0.0
        %512 = vmatprep.subr.mxu0 0.0
        %513 = vmatpush2.msra.mxu0 0.0
        %514 = vmatprep.subr.mxu0 0.0
        %515 = vmatpush2.msra.mxu0 0.0
        %516 = vmatprep.subr.mxu0 0.0
        %517 = vmatpush2.msra.mxu0 0.0
        %518 = vmatprep.subr.mxu0 0.0
        %519 = vmatpush2.msra.mxu0 0.0
        %520 = vmatprep.subr.mxu0 0.0
        %521 = vmatpush2.msra.mxu0 0.0
        %522 = vmatprep.subr.mxu0 0.0
        %523 = vmatpush2.msra.mxu0 0.0
        %524 = vmatprep.subr.mxu0 0.0
        %525 = vmatpush2.msra.mxu0 0.0
        %526 = vmatprep.subr.mxu0 0.0
        %527 = vmatpush2.msra.mxu0 0.0
        %528 = vmatprep.subr.mxu0 0.0
        %529 = vmatpush2.msra.mxu0 0.0
        %530 = vmatprep.subr.mxu0 0.0
        %531 = vmatpush2.msra.mxu0 0.0
        %532 = vmatprep.mubr.f32.mxu0 0.0
        %533 = vmatmul.mubr.f32.gmra.mxu0 %v463
        %v534 = vpop.f32.mrf.mxu0
        %v535 = vadd.f32 %v454, %v534
        %v536 = vpop.f32.mrf.mxu0
        %537 = vmatprep.mubr.f32.mxu0 0.0
        %538 = vmatmul.mubr.f32.gmra.mxu0 %v466
        %v539 = vpop.f32.mrf.mxu0
        %v540 = vadd.f32 %v459, %v539
        %v541 = vpop.f32.mrf.mxu0
        %542 = vdwg.mxu0
        %v543 = vsub.f32 0.0, %v535
        %v544 = vsub.f32 0.0, %v540
        %v545 = vmul.f32 %v543, 1.442695
        %v546 = vpow.pop %v545
        %v547 = vmul.f32 %v544, 1.442695
        %v548 = vpow.pop %v547
        %v549 = vadd.f32 %v546, 1.0
        %v550 = vadd.f32 %v548, 1.0
        %v551 = vrcp.pop %v549
        %v552 = vrcp.pop %v550
        %v553 = vpack.c.bf16 %v552, %v551
        %v555 = vunpack.c.l.b16 %v553
        %v556 = vunpack.c.h.b16 %v553
        %v557 = vpack.c.b16 %v555, %v555
        %v558 = vpack.c.b16 %v556, %v556
        %561 = vst [vmem:[%s239] sm:$0xf] %v557
        %562 = vst [vmem:[%s239 + $0x4] sm:$0xf] %v558
        %s563 = sand.u32 %s153, 1
        %s564 = scalar_lea.sflag [#allocation3], %s563
        %s565 = sand.u32 %s153, 1
        %s566 = smul.addr %s565, 8
        %s567 = scalar_lea.vmem [#allocation2], %s566
        // Predicated region
        $region41: #{tpu_custom_call.1} parent=39 // pred_check
          %p568 = pneg %p163
        $region42: #{tpu_custom_call.1} parent=39 // pred_check_branch
          %570 = sbr.rel (%p568) target = $region44
        $region43: #{tpu_custom_call.1} parent=39 // pred_region
          %s572 = ssub.s32 128, 128
          %573 = vsyncadd %s564, %s572
          %s574 = smul.addr %s23, 4
          %s575 = sadd.s32 %s24, %s574
          %s576 = smul.addr %s575, 64
          %s577 = scalar_lea.hbm %s5, %s576
          %s578 = sshll.u32 %s567, 4
          %s579 = int_to_ptr.vmem [resolvable:$true] %s578
          %584 = dma.vmem_to_hbm [thread:$0]  %s579, 128, %s577, %s564, 64, 128, 4
        $region44: #{tpu_custom_call.1} parent=39 // pred_fallthru
          _
      $region40: #{tpu_custom_call.1} parent=5 // pred_fallthru
        _
      %p585 = scmp.le.s32.totalorder 2, %s14
      // Predicated region
      $region45: #{tpu_custom_call.1} parent=5 // pred_check
        %p586 = pneg %p585
      $region46: #{tpu_custom_call.1} parent=5 // pred_check_branch
        %588 = sbr.rel (%p586) target = $region48
      $region47: #{tpu_custom_call.1} parent=5 // pred_region
        %s589 = ssub.s32 %s14, 2
        // Predicated region
        $region49: #{tpu_custom_call.1} parent=47 // pred_check
          %p590 = pneg %p169
        $region50: #{tpu_custom_call.1} parent=47 // pred_check_branch
          %592 = sbr.rel (%p590) target = $region52
        $region51: #{tpu_custom_call.1} parent=47 // pred_region
          %s593 = sand.u32 %s154, 1
          %s594 = scalar_lea.sflag [#allocation3], %s593
          %s595 = sand.u32 %s154, 1
          %s596 = smul.addr %s595, 8
          %s597 = scalar_lea.vmem [#allocation2], %s596
          %598 = dma.done %s594, 128
        $region52: #{tpu_custom_call.1} parent=47 // pred_fallthru
          _
      $region48: #{tpu_custom_call.1} parent=5 // pred_fallthru
        _
    $region6: #{tpu_custom_call.1} parent=1 // loop_footer
      %s18 = sadd.s32 1, %s14
    $region7: #{tpu_custom_call.1} parent=1 // loop_footer_branch
      %13 = sbr.rel target = $region3
    $region8: #{tpu_custom_call.1} parent=1 // loop_exit
      _
    %599 = vsyncpa [#allocation3], 1
    %s600 = scalar_lea.sflag [#allocation3], 1
    %601 = vsyncpa %s600, 1

</llo_original>
